<compile_context>
chip_gen: v5e
topology: v5e:2x2
jax: 0.10.0
libtpu: 0.0.40
codegen_flags: <defaults>
</compile_context>

<pallas_src>
import math
import jax
import jax.numpy as jnp
from jax.experimental import pallas as pl
from jax.experimental.pallas import tpu as pltpu


# --------------------------------------------------------------------------- kernel


def _lora_kernel(x_ref, a_ref, b_ref, o_ref, h_ref):
    # x_ref: (tm, in_dim)  a_ref: (in_dim, rank)  b_ref: (rank, tn)  [scale pre-folded]
    # h_ref: (tm, rank) f32 scratch, carried across the j (out_dim tile) axis.
    @pl.when(pl.program_id(1) == 0)
    def _():
        # First dot computed once per row tile, reused for every out_dim tile.
        h_ref[...] = jnp.dot(x_ref[...], a_ref[...],
                             preferred_element_type=jnp.float32)

    # Cast to the weight dtype so the second dot stays on the MXU's native path
    # (intentional precision drop when weights are bf16; covered by test tolerances).
    h = h_ref[...].astype(b_ref.dtype)
    y = jnp.dot(h, b_ref[...], preferred_element_type=jnp.float32)
    o_ref[...] = y.astype(o_ref.dtype)


# ----------------------------------------------------------------- VMEM / tile picking


def _round_up(x: int, m: int) -> int:
    return ((x + m - 1) // m) * m


def _padded_tile_bytes(rows: int, cols: int, dtype) -> int:
    """Bytes of one VMEM buffer after lane (128) / sublane (8 per 32-bit) padding."""
    it = jnp.dtype(dtype).itemsize
    sub = max(8, 32 // it)                      # 8 for f32, 16 for bf16
    return _round_up(max(rows, 1), sub) * _round_up(max(cols, 1), 128) * it


def _vmem_need(tm: int, tn: int, in_dim: int, rank: int, in_dtype, out_dtype) -> int:
    """Conservative (double-buffered A) padded VMEM requirement of one grid step."""
    need = 2 * _padded_tile_bytes(tm, in_dim, in_dtype)      # x row tile (2 bufs)
    need += 2 * _padded_tile_bytes(in_dim, rank, in_dtype)   # A^T (rank pads to 128!)
    need += 2 * _padded_tile_bytes(rank, tn, in_dtype)       # B^T column tile
    need += 2 * _padded_tile_bytes(tm, tn, out_dtype)        # output tile
    need += _padded_tile_bytes(tm, rank, jnp.float32)        # h scratch
    need += _padded_tile_bytes(tm, rank, jnp.float32)        # first-dot f32 temp
    need += _padded_tile_bytes(tm, tn, jnp.float32)          # second-dot f32 temp
    return need


def _vmem_capacity_bytes() -> int:
    try:
        return int(pltpu.get_tpu_info().vmem_capacity_bytes)
    except Exception:
        return 64 << 20      # conservative (v7x-sized) fallback


def _pick_tn(out_dim_p: int, max_tn: int = 1024) -> int:
    """out_dim_p is already a multiple of 128; pick a lane-dense divisor tile."""
    if out_dim_p <= max_tn:
        return out_dim_p
    for tn in range(max_tn, 127, -128):
        if out_dim_p % tn == 0:
            return tn
    return 128


def _pick_tm(M: int, in_dim: int, tn: int, rank: int, in_dtype, out_dtype,
             budget_bytes: int, max_tm: int = 2048) -> int:
    """Largest power-of-two row tile whose padded working set fits the budget."""
    sub = max(8, 32 // jnp.dtype(in_dtype).itemsize)
    tm = max_tm
    while tm > sub and _vmem_need(tm, tn, in_dim, rank, in_dtype, out_dtype) > budget_bytes:
        tm //= 2
    tm = max(sub, tm)
    return min(tm, _round_up(M, sub))


# --------------------------------------------------------------------------- wrapper


def lora_forward(x, a_t, b_t, *, tm=None, tn=None):
    """Fused LoRA forward: (x @ a_t) @ b_t.

    x:   (M, in_dim)
    a_t: (in_dim, rank)   -- lora_A.weight.T
    b_t: (rank, out_dim)  -- lora_B.weight.T with `scale` already folded in
    Returns (M, out_dim) in x.dtype.
    """
    M, in_dim = x.shape
    rank, out_dim = b_t.shape
    assert a_t.shape == (in_dim, rank), (a_t.shape, (in_dim, rank))
    out_dtype = x.dtype

    # Lane-dense output stores: pad out_dim to a multiple of 128 (slice afterwards).
    out_dim_p = _round_up(out_dim, 128)
    b_t_p = b_t if out_dim_p == out_dim else jnp.pad(b_t, ((0, 0), (0, out_dim_p - out_dim)))

    vmem_cap = _vmem_capacity_bytes()
    limit_cap = int(vmem_cap * 0.8)             # ~51 MiB on v7x, ~102 MiB on v5e/v6e
    budget = max(limit_cap - (8 << 20), 8 << 20)

    if tn is None:
        tn = _pick_tn(out_dim_p)
    if tm is None:
        tm = _pick_tm(M, in_dim, tn, rank, x.dtype, out_dtype, budget)

    grid = (pl.cdiv(M, tm), out_dim_p // tn)    # no jnp.pad of x: ragged tail is masked

    need = _vmem_need(tm, tn, in_dim, rank, x.dtype, out_dtype)
    vmem_limit = int(min(max(need + (8 << 20), 32 << 20), limit_cap))

    cost = pl.CostEstimate(
        flops=2 * M * rank * (in_dim + out_dim_p),
        transcendentals=0,
        bytes_accessed=(x.size * x.dtype.itemsize
                        + a_t.size * a_t.dtype.itemsize
                        + b_t_p.size * b_t_p.dtype.itemsize
                        + M * out_dim_p * jnp.dtype(out_dtype).itemsize),
    )

    def _call(single_buffer_a: bool):
        # A^T is read with a constant index_map -> a second pipeline buffer is waste.
        a_kwargs = {"pipeline_mode": pl.Buffered(1)} if single_buffer_a else {}
        return pl.pallas_call(
            _lora_kernel,
            out_shape=jax.ShapeDtypeStruct((M, out_dim_p), out_dtype),
            grid_spec=pltpu.PrefetchScalarGridSpec(
                num_scalar_prefetch=0,
                grid=grid,
                in_specs=[
                    pl.BlockSpec((tm, in_dim), lambda i, j: (i, 0)),             # x rows
                    pl.BlockSpec((in_dim, rank), lambda i, j: (0, 0), **a_kwargs),  # A^T
                    pl.BlockSpec((rank, tn), lambda i, j: (0, j)),               # B^T cols
                ],
                out_specs=pl.BlockSpec((tm, tn), lambda i, j: (i, j)),
                scratch_shapes=[pltpu.VMEM((tm, rank), jnp.float32)],            # h
            ),
            compiler_params=pltpu.CompilerParams(
                # i parallel (v7x 2-TC sharding over rows); j arbitrary (h scratch
                # is carried across the out_dim tiles).
                dimension_semantics=("parallel", "arbitrary"),
                vmem_limit_bytes=vmem_limit,
            ),
            cost_estimate=cost,
        )(x, a_t, b_t_p)

    try:
        out = _call(True)
    except Exception:
        out = _call(False)   # pipeline_mode=Buffered(1) unsupported in this build

    return out if out_dim_p == out_dim else out[:, :out_dim]


# ----------------------------------------------------------------------------- module


class LoRALayerPallas:
    """JAX/Pallas port of the PyTorch LoRALayer (forward: lora_B(lora_A(x)) * scale)."""

    def __init__(self, in_dim: int, out_dim: int, rank: int = 4, alpha: float = 1.0,
                 key=None, dtype=jnp.float32):
        self.in_dim = in_dim
        self.out_dim = out_dim
        self.rank = rank
        self.alpha = alpha
        self.scale = alpha / rank
        if key is None:
            key = jax.random.PRNGKey(0)
        # nn.init.kaiming_uniform_(lora_A.weight, a=sqrt(5)) on (rank, in_dim):
        # bound = sqrt(3) * sqrt(2/(1+5)) / sqrt(in_dim) = 1/sqrt(in_dim)
        bound = 1.0 / math.sqrt(in_dim)
        lora_A_w = jax.random.uniform(key, (rank, in_dim), dtype=dtype,
                                      minval=-bound, maxval=bound)
        lora_B_w = jnp.zeros((out_dim, rank), dtype=dtype)    # nn.init.zeros_
        self.a_t = lora_A_w.T                                  # (in_dim, rank)
        # Scale folded into B^T so the kernel has no epilogue multiply.
        self.b_t = lora_B_w.T * jnp.asarray(self.scale, dtype=dtype)   # (rank, out_dim)

    def set_weights(self, lora_A_w, lora_B_w):
        """Load (rank, in_dim) / (out_dim, rank) weights (PyTorch layout)."""
        lora_A_w = jnp.asarray(lora_A_w)
        lora_B_w = jnp.asarray(lora_B_w)
        self.a_t = lora_A_w.T
        self.b_t = lora_B_w.T * jnp.asarray(self.scale, dtype=lora_B_w.dtype)

    def __call__(self, x):
        lead = x.shape[:-1]
        x2d = x.reshape(-1, self.in_dim)
        out = lora_forward(x2d, self.a_t, self.b_t)
        return out.reshape(*lead, self.out_dim)


# ------------------------------------------------------------------------------ main


if __name__ == "__main__":
    key = jax.random.PRNGKey(0)
    k_x, k_a, k_b = jax.random.split(key, 3)

    batch, seq, in_dim, out_dim, rank = 2, 8, 32, 32, 4
    x = jax.random.normal(k_x, (batch, seq, in_dim), dtype=jnp.float32)

    # 1) Faithful init (lora_B zeros) -> output must be exactly zero, like PyTorch.
    layer = LoRALayerPallas(in_dim, out_dim, rank=rank, alpha=1.0, key=k_a)
    y0 = jax.block_until_ready(layer(x))
    assert y0.shape == (batch, seq, out_dim)
    assert jnp.allclose(y0, 0.0)

    # 2) Random B so the matmul path is actually validated (not zeros-vs-zeros).
    bound = 1.0 / math.sqrt(in_dim)
    a_w = jax.random.uniform(k_a, (rank, in_dim), minval=-bound, maxval=bound)
    b_w = jax.random.normal(k_b, (out_dim, rank)) * 0.1
    layer.set_weights(a_w, b_w)
    y = jax.block_until_ready(layer(x))
    ref = (x.reshape(-1, in_dim) @ a_w.T @ b_w.T * layer.scale).reshape(batch, seq, out_dim)
    assert jnp.allclose(y, ref, atol=5e-3, rtol=5e-3), float(jnp.max(jnp.abs(y - ref)))

    # 3) bf16 storage path (halves HBM traffic on the mem-bound kernel).
    xb = x.reshape(-1, in_dim).astype(jnp.bfloat16)
    ab = (a_w.T).astype(jnp.bfloat16)
    bb = (b_w.T * layer.scale).astype(jnp.bfloat16)
    yb = jax.block_until_ready(lora_forward(xb, ab, bb))
    refb = xb.astype(jnp.float32) @ ab.astype(jnp.float32) @ bb.astype(jnp.float32)
    assert jnp.allclose(yb.astype(jnp.float32), refb, atol=5e-2, rtol=5e-2)

    # 4) M not divisible by the row tile -> ragged-tail masking path (no jnp.pad copy).
    x_tail = jax.random.normal(k_b, (7, in_dim), dtype=jnp.float32)
    y_tail = jax.block_until_ready(lora_forward(x_tail, a_w.T, b_w.T * layer.scale))
    ref_tail = x_tail @ a_w.T @ b_w.T * layer.scale
    assert y_tail.shape == (7, out_dim)
    assert jnp.allclose(y_tail, ref_tail, atol=5e-3, rtol=5e-3)

    print("KERNEL_OK")
</pallas_src>

<mosaic_0001>
module attributes {stable_mosaic.version = 11 : i64} {
  func.func @_lora_kernel(%arg0: i32, %arg1: i32, %arg2: memref<16x32xf32, #tpu.memory_space<vmem>>, %arg3: memref<32x4xf32, #tpu.memory_space<vmem>>, %arg4: memref<4x128xf32, #tpu.memory_space<vmem>>, %arg5: memref<16x128xf32, #tpu.memory_space<vmem>>, %arg6: memref<16x4xf32, #tpu.memory_space<vmem>>) attributes {dimension_semantics = [#tpu.dimension_semantics<parallel>, #tpu.dimension_semantics<arbitrary>], iteration_bounds = array<i64: 1, 1>, scalar_prefetch = 0 : i64, scratch_operands = 1 : i64, tpu.core_type = #tpu.core_type<tc>, window_params = [{transform_indices = @transform_0, window_bounds = array<i64: 16, 32>}, {pipeline_mode = #tpu.pipeline_mode<synchronous>, transform_indices = @transform_1, window_bounds = array<i64: 32, 4>}, {transform_indices = @transform_2, window_bounds = array<i64: 4, 128>}, {transform_indices = @transform_3, window_bounds = array<i64: 16, 128>}]} {
    %c0_i32 = arith.constant 0 : i32
    %0 = arith.cmpi eq, %arg1, %c0_i32 : i32
    %1 = arith.extui %0 : i1 to i32
    %c0_i32_0 = arith.constant 0 : i32
    %2 = arith.cmpi ne, %1, %c0_i32_0 : i32
    scf.if %2 {
      %c0_6 = arith.constant 0 : index
      %c0_7 = arith.constant 0 : index
      %7 = vector.load %arg2[%c0_6, %c0_7] : memref<16x32xf32, #tpu.memory_space<vmem>>, vector<16x32xf32>
      %c0_8 = arith.constant 0 : index
      %c0_9 = arith.constant 0 : index
      %8 = vector.load %arg3[%c0_8, %c0_9] : memref<32x4xf32, #tpu.memory_space<vmem>>, vector<32x4xf32>
      %cst_10 = arith.constant dense<0.000000e+00> : vector<16x4xf32>
      %9 = tpu.matmul %7, %8, %cst_10 {dimension_numbers = #tpu.dot_dimension_numbers<[1], [0], [0], [1], [0, 0, 1, 1], [], []>} : vector<16x32xf32>, vector<32x4xf32>, vector<16x4xf32> -> vector<16x4xf32>
      %c0_11 = arith.constant 0 : index
      %c0_12 = arith.constant 0 : index
      %10 = vector.load %arg6[%c0_11, %c0_12] : memref<16x4xf32, #tpu.memory_space<vmem>>, vector<16x4xf32>
      tpu.vector_store %arg6[%c0_11, %c0_12], %9 {strides = array<i32>} : memref<16x4xf32, #tpu.memory_space<vmem>>, vector<16x4xf32>,
    } else {
    }
    %c0 = arith.constant 0 : index
    %c0_1 = arith.constant 0 : index
    %3 = vector.load %arg6[%c0, %c0_1] : memref<16x4xf32, #tpu.memory_space<vmem>>, vector<16x4xf32>
    %c0_2 = arith.constant 0 : index
    %c0_3 = arith.constant 0 : index
    %4 = vector.load %arg4[%c0_2, %c0_3] : memref<4x128xf32, #tpu.memory_space<vmem>>, vector<4x128xf32>
    %cst = arith.constant dense<0.000000e+00> : vector<16x128xf32>
    %5 = tpu.matmul %3, %4, %cst {dimension_numbers = #tpu.dot_dimension_numbers<[1], [0], [0], [1], [0, 0, 1, 1], [], []>} : vector<16x4xf32>, vector<4x128xf32>, vector<16x128xf32> -> vector<16x128xf32>
    %c0_4 = arith.constant 0 : index
    %c0_5 = arith.constant 0 : index
    %6 = vector.load %arg5[%c0_4, %c0_5] : memref<16x128xf32, #tpu.memory_space<vmem>>, vector<16x128xf32>
    tpu.vector_store %arg5[%c0_4, %c0_5], %5 {strides = array<i32>} : memref<16x128xf32, #tpu.memory_space<vmem>>, vector<16x128xf32>,
    return
  }
  func.func @transform_0(%arg0: i32, %arg1: i32) -> (i32, i32) {
    %c0_i32 = arith.constant 0 : i32
    %c0_i32_0 = arith.constant 0 : i32
    return %arg0, %c0_i32 : i32, i32
  }
  func.func @transform_1(%arg0: i32, %arg1: i32) -> (i32, i32) {
    %c0_i32 = arith.constant 0 : i32
    %c0_i32_0 = arith.constant 0 : i32
    %c0_i32_1 = arith.constant 0 : i32
    return %c0_i32, %c0_i32_0 : i32, i32
  }
  func.func @transform_2(%arg0: i32, %arg1: i32) -> (i32, i32) {
    %c0_i32 = arith.constant 0 : i32
    %c0_i32_0 = arith.constant 0 : i32
    return %c0_i32, %arg1 : i32, i32
  }
  func.func @transform_3(%arg0: i32, %arg1: i32) -> (i32, i32) {
    %c0_i32 = arith.constant 0 : i32
    return %arg0, %arg1 : i32, i32
  }
}

module attributes {stable_mosaic.version = 11 : i64} {
  func.func @_lora_kernel(%arg0: i32, %arg1: i32, %arg2: memref<16x32xf32, #tpu.memory_space<vmem>>, %arg3: memref<32x4xf32, #tpu.memory_space<vmem>>, %arg4: memref<4x128xf32, #tpu.memory_space<vmem>>, %arg5: memref<16x128xf32, #tpu.memory_space<vmem>>, %arg6: memref<16x4xf32, #tpu.memory_space<vmem>>) attributes {dimension_semantics = [#tpu.dimension_semantics<parallel>, #tpu.dimension_semantics<arbitrary>], iteration_bounds = array<i64: 1, 1>, scalar_prefetch = 0 : i64, scratch_operands = 1 : i64, tpu.core_type = #tpu.core_type<tc>, window_params = [{transform_indices = @transform_0, window_bounds = array<i64: 16, 32>}, {pipeline_mode = #tpu.pipeline_mode<synchronous>, transform_indices = @transform_1, window_bounds = array<i64: 32, 4>}, {transform_indices = @transform_2, window_bounds = array<i64: 4, 128>}, {transform_indices = @transform_3, window_bounds = array<i64: 16, 128>}]} {
    %c0_i32 = arith.constant 0 : i32
    %0 = arith.cmpi eq, %arg1, %c0_i32 : i32
    %1 = arith.extui %0 : i1 to i32
    %c0_i32_0 = arith.constant 0 : i32
    %2 = arith.cmpi ne, %1, %c0_i32_0 : i32
    scf.if %2 {
      %c0_6 = arith.constant 0 : index
      %c0_7 = arith.constant 0 : index
      %7 = vector.load %arg2[%c0_6, %c0_7] : memref<16x32xf32, #tpu.memory_space<vmem>>, vector<16x32xf32>
      %c0_8 = arith.constant 0 : index
      %c0_9 = arith.constant 0 : index
      %8 = vector.load %arg3[%c0_8, %c0_9] : memref<32x4xf32, #tpu.memory_space<vmem>>, vector<32x4xf32>
      %cst_10 = arith.constant dense<0.000000e+00> : vector<16x4xf32>
      %9 = tpu.matmul %7, %8, %cst_10 {dimension_numbers = #tpu.dot_dimension_numbers<[1], [0], [0], [1], [0, 0, 1, 1], [], []>} : vector<16x32xf32>, vector<32x4xf32>, vector<16x4xf32> -> vector<16x4xf32>
      %c0_11 = arith.constant 0 : index
      %c0_12 = arith.constant 0 : index
      %10 = vector.load %arg6[%c0_11, %c0_12] : memref<16x4xf32, #tpu.memory_space<vmem>>, vector<16x4xf32>
      tpu.vector_store %arg6[%c0_11, %c0_12], %9 {strides = array<i32>} : memref<16x4xf32, #tpu.memory_space<vmem>>, vector<16x4xf32>,
    } else {
    }
    %c0 = arith.constant 0 : index
    %c0_1 = arith.constant 0 : index
    %3 = vector.load %arg6[%c0, %c0_1] : memref<16x4xf32, #tpu.memory_space<vmem>>, vector<16x4xf32>
    %c0_2 = arith.constant 0 : index
    %c0_3 = arith.constant 0 : index
    %4 = vector.load %arg4[%c0_2, %c0_3] : memref<4x128xf32, #tpu.memory_space<vmem>>, vector<4x128xf32>
    %cst = arith.constant dense<0.000000e+00> : vector<16x128xf32>
    %5 = tpu.matmul %3, %4, %cst {dimension_numbers = #tpu.dot_dimension_numbers<[1], [0], [0], [1], [0, 0, 1, 1], [], []>} : vector<16x4xf32>, vector<4x128xf32>, vector<16x128xf32> -> vector<16x128xf32>
    %c0_4 = arith.constant 0 : index
    %c0_5 = arith.constant 0 : index
    %6 = vector.load %arg5[%c0_4, %c0_5] : memref<16x128xf32, #tpu.memory_space<vmem>>, vector<16x128xf32>
    tpu.vector_store %arg5[%c0_4, %c0_5], %5 {strides = array<i32>} : memref<16x128xf32, #tpu.memory_space<vmem>>, vector<16x128xf32>,
    return
  }
  func.func @transform_0(%arg0: i32, %arg1: i32) -> (i32, i32) {
    %c0_i32 = arith.constant 0 : i32
    %c0_i32_0 = arith.constant 0 : i32
    return %arg0, %c0_i32 : i32, i32
  }
  func.func @transform_1(%arg0: i32, %arg1: i32) -> (i32, i32) {
    %c0_i32 = arith.constant 0 : i32
    %c0_i32_0 = arith.constant 0 : i32
    %c0_i32_1 = arith.constant 0 : i32
    return %c0_i32, %c0_i32_0 : i32, i32
  }
  func.func @transform_2(%arg0: i32, %arg1: i32) -> (i32, i32) {
    %c0_i32 = arith.constant 0 : i32
    %c0_i32_0 = arith.constant 0 : i32
    return %c0_i32, %arg1 : i32, i32
  }
  func.func @transform_3(%arg0: i32, %arg1: i32) -> (i32, i32) {
    %c0_i32 = arith.constant 0 : i32
    return %arg0, %arg1 : i32, i32
  }
}

</mosaic_0001>

<llo_original>
// kernel: tpu_custom_call.1
$region0: #{tpu_custom_call.1}
  #allocation0 [shape = 'u32[]', space=smem, size = 0x4, offset = 0x4, fixed_abs, tag = 'smem constant byte address 0x4 - core index']
  #allocation1 [shape = 'u32[72,128]{1,0:T(1,128)}', space=vmem, size = 0x9000, scoped, tag = 'internal scratch']
  #allocation2 [shape = 'f32[16,4]{1,0:T(8,128)}', space=vmem, size = 0x2000, scoped, tag = 'scratch operand']
  %s0 = inlined_call_operand.vmem [shape: f32[16,32], index: 0, kind: input, shape index: {}]
  %s1 = inlined_call_operand.vmem [shape: f32[32,4], index: 1, kind: input, shape index: {}]
  %s2 = inlined_call_operand.vmem [shape: f32[4,128], index: 2, kind: input, shape index: {}]
  %s3 = inlined_call_operand.hbm [shape: f32[16,128], index: 3, kind: output, shape index: {}]
  %s4 = sld [smem:[#allocation0]]
  $region26: #{tpu_custom_call.1} parent=0
    _
  %s6 = ssub.s32 1, %s4
  %s7 = scalar_select 0, %s6, %s4
  $region1: #{tpu_custom_call.1} parent=0
    #allocation3 [shape = 'u8[8192]{0}', space=vmem, size = 0x2000, scoped, tag = 'output window, operand 0, single buffered']
    #allocation4 [shape = 's32[1]{0}', space=sflag, size = 0x4, scoped, tag = 'scoped memory for tpu_custom_call.1']
    %8 = vsyncpa [#allocation4], 0
    // Predicated region
    $region2: #{tpu_custom_call.1} parent=1 // pred_check
      _
    $region3: #{tpu_custom_call.1} parent=1 // pred_check_branch
      %10 = sbr.rel (0) target = $region5
    $region4: #{tpu_custom_call.1} parent=1 // pred_region
      _
    $region5: #{tpu_custom_call.1} parent=1 // pred_fallthru
      _
    // Predicated region
    $region6: #{tpu_custom_call.1} parent=1 // pred_check
      _
    $region7: #{tpu_custom_call.1} parent=1 // pred_check_branch
      %12 = sbr.rel (0) target = $region9
    $region8: #{tpu_custom_call.1} parent=1 // pred_region
      _
    $region9: #{tpu_custom_call.1} parent=1 // pred_fallthru
      _
    // Predicated region
    $region10: #{tpu_custom_call.1} parent=1 // pred_check
      _
    $region11: #{tpu_custom_call.1} parent=1 // pred_check_branch
      %14 = sbr.rel (0) target = $region13
    $region12: #{tpu_custom_call.1} parent=1 // pred_region
      _
    $region13: #{tpu_custom_call.1} parent=1 // pred_fallthru
      _
    %p15 = scmp.eq.s32.totalorder 0, 0
    // Predicated region
    $region14: #{tpu_custom_call.1} parent=1 // pred_check
      %p16 = pneg %p15
    $region15: #{tpu_custom_call.1} parent=1 // pred_check_branch
      %18 = sbr.rel (%p16) target = $region17
    $region16: #{tpu_custom_call.1} parent=1 // pred_region
      %v19 = vld [vmem:[%s0] sm:$0xff]
      %v20 = vld [vmem:[%s0 + $0x8] sm:$0xff]
      %v21 = vld [vmem:[%s1] sm:$0xff]
      %v22 = vld [vmem:[%s1 + $0x8] sm:$0xff]
      %v23 = vld [vmem:[%s1 + $0x10] sm:$0xff]
      %v24 = vld [vmem:[%s1 + $0x18] sm:$0xff]
      %vm25 = vcmask 261120
      %v27 = vsel %vm25, %v19, 0
      %v30 = vsel %vm25, %v20, 0
      %32 = vmatpush.msra.mxu0 0.0
      %33 = vmatpush.msra.mxu0 0.0
      %34 = vmatpush.msra.mxu0 0.0
      %35 = vmatpush.msra.mxu0 0.0
      %36 = vmatpush.msra.mxu0 0.0
      %37 = vmatpush.msra.mxu0 0.0
      %38 = vmatpush.msra.mxu0 0.0
      %39 = vmatpush.msra.mxu0 0.0
      %40 = vmatpush.msra.mxu0 0.0
      %41 = vmatpush.msra.mxu0 0.0
      %42 = vmatpush.msra.mxu0 0.0
      %43 = vmatpush.msra.mxu0 0.0
      %44 = vmatpush.msra.mxu0 %v24
      %45 = vmatpush.msra.mxu0 %v23
      %46 = vmatpush.msra.mxu0 %v22
      %47 = vmatpush.msra.mxu0 %v21
      %48 = vmatmul.f32.gmra.mxu0 %v27
      %v49 = vpop.f32.mrf.mxu0
      %v50 = vadd.f32 0.0, %v49
      %51 = vmatmul.f32.gmra.mxu0 %v30
      %v52 = vpop.f32.mrf.mxu0
      %v53 = vadd.f32 0.0, %v52
      %54 = vdwg.mxu0
      %vm55 = vcmask 31744
      %56 = vst.msk [vmem:[#allocation2] sm:$0xff] %vm55, %v50
      %57 = vst.msk [vmem:[#allocation2 + $0x8] sm:$0xff] %vm55, %v53
    $region17: #{tpu_custom_call.1} parent=1 // pred_fallthru
      _
    %v58 = vld [vmem:[#allocation2] sm:$0xff]
    %v59 = vld [vmem:[#allocation2 + $0x8] sm:$0xff]
    %v60 = vld [vmem:[%s2] sm:$0xf]
    %vm61 = vcmask 31744
    %v63 = vsel %vm61, %v58, 0
    %v66 = vsel %vm61, %v59, 0
    %vm68 = vcmask 1043456
    %v70 = vsel %vm68, %v60, 0
    %72 = vmatpush.msra.mxu0 0.0
    %73 = vmatpush.msra.mxu0 0.0
    %74 = vmatpush.msra.mxu0 0.0
    %75 = vmatpush.msra.mxu0 0.0
    %76 = vmatpush.msra.mxu0 0.0
    %77 = vmatpush.msra.mxu0 0.0
    %78 = vmatpush.msra.mxu0 0.0
    %79 = vmatpush.msra.mxu0 0.0
    %80 = vmatpush.msra.mxu0 0.0
    %81 = vmatpush.msra.mxu0 0.0
    %82 = vmatpush.msra.mxu0 0.0
    %83 = vmatpush.msra.mxu0 0.0
    %84 = vmatpush.msra.mxu0 0.0
    %85 = vmatpush.msra.mxu0 0.0
    %86 = vmatpush.msra.mxu0 0.0
    %87 = vmatpush.msra.mxu0 %v70
    %88 = vmatmul.f32.gmra.mxu0 %v63
    %v89 = vpop.f32.mrf.mxu0
    %v90 = vadd.f32 0.0, %v89
    %91 = vmatmul.f32.gmra.mxu0 %v66
    %v92 = vpop.f32.mrf.mxu0
    %v93 = vadd.f32 0.0, %v92
    %94 = vdwg.mxu0
    %95 = vst [vmem:[#allocation3] sm:$0xff] %v90
    %96 = vst [vmem:[#allocation3 + $0x8] sm:$0xff] %v93
    // Predicated region
    $region18: #{tpu_custom_call.1} parent=1 // pred_check
      _
    $region19: #{tpu_custom_call.1} parent=1 // pred_check_branch
      %98 = sbr.rel (0) target = $region21
    $region20: #{tpu_custom_call.1} parent=1 // pred_region
      %100 = vsyncadd [#allocation4], 0
      %s101 = sshll.u32 [#allocation3], 4
      %s102 = int_to_ptr.vmem [resolvable:$true] %s101
      %s103 = sshll.u32 %s3, 4
      %s104 = int_to_ptr.hbm [resolvable:$true] %s103
      %109 = dma.vmem_to_hbm [thread:$0]  %s102, 256, %s104, [#allocation4], 128, 128, 8
    $region21: #{tpu_custom_call.1} parent=1 // pred_fallthru
      _
    // Predicated region
    $region22: #{tpu_custom_call.1} parent=1 // pred_check
      _
    $region23: #{tpu_custom_call.1} parent=1 // pred_check_branch
      %111 = sbr.rel (0) target = $region25
    $region24: #{tpu_custom_call.1} parent=1 // pred_region
      %113 = dma.done [#allocation4], 256
    $region25: #{tpu_custom_call.1} parent=1 // pred_fallthru
      _
    %114 = vsyncpa [#allocation4], 1

// kernel: tpu_custom_call.1
$region0: #{tpu_custom_call.1}
  #allocation0 [shape = 'u32[]', space=smem, size = 0x4, offset = 0x4, fixed_abs, tag = 'smem constant byte address 0x4 - core index']
  #allocation1 [shape = 'u32[72,128]{1,0:T(1,128)}', space=vmem, size = 0x9000, scoped, tag = 'internal scratch']
  #allocation2 [shape = 'f32[16,4]{1,0:T(8,128)}', space=vmem, size = 0x2000, scoped, tag = 'scratch operand']
  %s0 = inlined_call_operand.vmem [shape: f32[16,32], index: 0, kind: input, shape index: {}]
  %s1 = inlined_call_operand.vmem [shape: f32[32,4], index: 1, kind: input, shape index: {}]
  %s2 = inlined_call_operand.vmem [shape: f32[4,128], index: 2, kind: input, shape index: {}]
  %s3 = inlined_call_operand.hbm [shape: f32[16,128], index: 3, kind: output, shape index: {}]
  %s4 = sld [smem:[#allocation0]]
  $region26: #{tpu_custom_call.1} parent=0
    _
  %s6 = ssub.s32 1, %s4
  %s7 = scalar_select 0, %s6, %s4
  $region1: #{tpu_custom_call.1} parent=0
    #allocation3 [shape = 'u8[8192]{0}', space=vmem, size = 0x2000, scoped, tag = 'output window, operand 0, single buffered']
    #allocation4 [shape = 's32[1]{0}', space=sflag, size = 0x4, scoped, tag = 'scoped memory for tpu_custom_call.1']
    %8 = vsyncpa [#allocation4], 0
    // Predicated region
    $region2: #{tpu_custom_call.1} parent=1 // pred_check
      _
    $region3: #{tpu_custom_call.1} parent=1 // pred_check_branch
      %10 = sbr.rel (0) target = $region5
    $region4: #{tpu_custom_call.1} parent=1 // pred_region
      _
    $region5: #{tpu_custom_call.1} parent=1 // pred_fallthru
      _
    // Predicated region
    $region6: #{tpu_custom_call.1} parent=1 // pred_check
      _
    $region7: #{tpu_custom_call.1} parent=1 // pred_check_branch
      %12 = sbr.rel (0) target = $region9
    $region8: #{tpu_custom_call.1} parent=1 // pred_region
      _
    $region9: #{tpu_custom_call.1} parent=1 // pred_fallthru
      _
    // Predicated region
    $region10: #{tpu_custom_call.1} parent=1 // pred_check
      _
    $region11: #{tpu_custom_call.1} parent=1 // pred_check_branch
      %14 = sbr.rel (0) target = $region13
    $region12: #{tpu_custom_call.1} parent=1 // pred_region
      _
    $region13: #{tpu_custom_call.1} parent=1 // pred_fallthru
      _
    %p15 = scmp.eq.s32.totalorder 0, 0
    // Predicated region
    $region14: #{tpu_custom_call.1} parent=1 // pred_check
      %p16 = pneg %p15
    $region15: #{tpu_custom_call.1} parent=1 // pred_check_branch
      %18 = sbr.rel (%p16) target = $region17
    $region16: #{tpu_custom_call.1} parent=1 // pred_region
      %v19 = vld [vmem:[%s0] sm:$0xff]
      %v20 = vld [vmem:[%s0 + $0x8] sm:$0xff]
      %v21 = vld [vmem:[%s1] sm:$0xff]
      %v22 = vld [vmem:[%s1 + $0x8] sm:$0xff]
      %v23 = vld [vmem:[%s1 + $0x10] sm:$0xff]
      %v24 = vld [vmem:[%s1 + $0x18] sm:$0xff]
      %vm25 = vcmask 261120
      %v27 = vsel %vm25, %v19, 0
      %v30 = vsel %vm25, %v20, 0
      %32 = vmatpush.msra.mxu0 0.0
      %33 = vmatpush.msra.mxu0 0.0
      %34 = vmatpush.msra.mxu0 0.0
      %35 = vmatpush.msra.mxu0 0.0
      %36 = vmatpush.msra.mxu0 0.0
      %37 = vmatpush.msra.mxu0 0.0
      %38 = vmatpush.msra.mxu0 0.0
      %39 = vmatpush.msra.mxu0 0.0
      %40 = vmatpush.msra.mxu0 0.0
      %41 = vmatpush.msra.mxu0 0.0
      %42 = vmatpush.msra.mxu0 0.0
      %43 = vmatpush.msra.mxu0 0.0
      %44 = vmatpush.msra.mxu0 %v24
      %45 = vmatpush.msra.mxu0 %v23
      %46 = vmatpush.msra.mxu0 %v22
      %47 = vmatpush.msra.mxu0 %v21
      %48 = vmatmul.f32.gmra.mxu0 %v27
      %v49 = vpop.f32.mrf.mxu0
      %v50 = vadd.f32 0.0, %v49
      %51 = vmatmul.f32.gmra.mxu0 %v30
      %v52 = vpop.f32.mrf.mxu0
      %v53 = vadd.f32 0.0, %v52
      %54 = vdwg.mxu0
      %vm55 = vcmask 31744
      %56 = vst.msk [vmem:[#allocation2] sm:$0xff] %vm55, %v50
      %57 = vst.msk [vmem:[#allocation2 + $0x8] sm:$0xff] %vm55, %v53
    $region17: #{tpu_custom_call.1} parent=1 // pred_fallthru
      _
    %v58 = vld [vmem:[#allocation2] sm:$0xff]
    %v59 = vld [vmem:[#allocation2 + $0x8] sm:$0xff]
    %v60 = vld [vmem:[%s2] sm:$0xf]
    %vm61 = vcmask 31744
    %v63 = vsel %vm61, %v58, 0
    %v66 = vsel %vm61, %v59, 0
    %vm68 = vcmask 1043456
    %v70 = vsel %vm68, %v60, 0
    %72 = vmatpush.msra.mxu0 0.0
    %73 = vmatpush.msra.mxu0 0.0
    %74 = vmatpush.msra.mxu0 0.0
    %75 = vmatpush.msra.mxu0 0.0
    %76 = vmatpush.msra.mxu0 0.0
    %77 = vmatpush.msra.mxu0 0.0
    %78 = vmatpush.msra.mxu0 0.0
    %79 = vmatpush.msra.mxu0 0.0
    %80 = vmatpush.msra.mxu0 0.0
    %81 = vmatpush.msra.mxu0 0.0
    %82 = vmatpush.msra.mxu0 0.0
    %83 = vmatpush.msra.mxu0 0.0
    %84 = vmatpush.msra.mxu0 0.0
    %85 = vmatpush.msra.mxu0 0.0
    %86 = vmatpush.msra.mxu0 0.0
    %87 = vmatpush.msra.mxu0 %v70
    %88 = vmatmul.f32.gmra.mxu0 %v63
    %v89 = vpop.f32.mrf.mxu0
    %v90 = vadd.f32 0.0, %v89
    %91 = vmatmul.f32.gmra.mxu0 %v66
    %v92 = vpop.f32.mrf.mxu0
    %v93 = vadd.f32 0.0, %v92
    %94 = vdwg.mxu0
    %95 = vst [vmem:[#allocation3] sm:$0xff] %v90
    %96 = vst [vmem:[#allocation3 + $0x8] sm:$0xff] %v93
    // Predicated region
    $region18: #{tpu_custom_call.1} parent=1 // pred_check
      _
    $region19: #{tpu_custom_call.1} parent=1 // pred_check_branch
      %98 = sbr.rel (0) target = $region21
    $region20: #{tpu_custom_call.1} parent=1 // pred_region
      %100 = vsyncadd [#allocation4], 0
      %s101 = sshll.u32 [#allocation3], 4
      %s102 = int_to_ptr.vmem [resolvable:$true] %s101
      %s103 = sshll.u32 %s3, 4
      %s104 = int_to_ptr.hbm [resolvable:$true] %s103
      %109 = dma.vmem_to_hbm [thread:$0]  %s102, 256, %s104, [#allocation4], 128, 128, 8
    $region21: #{tpu_custom_call.1} parent=1 // pred_fallthru
      _
    // Predicated region
    $region22: #{tpu_custom_call.1} parent=1 // pred_check
      _
    $region23: #{tpu_custom_call.1} parent=1 // pred_check_branch
      %111 = sbr.rel (0) target = $region25
    $region24: #{tpu_custom_call.1} parent=1 // pred_region
      %113 = dma.done [#allocation4], 256
    $region25: #{tpu_custom_call.1} parent=1 // pred_fallthru
      _
    %114 = vsyncpa [#allocation4], 1

</llo_original>
